<compile_context>
chip_gen: v7x
topology: tpu7x:2x2x1
jax: 0.10.0
libtpu: 0.0.40
codegen_flags: <defaults>
</compile_context>

<pallas_src>
import jax
import jax.numpy as jnp
from jax.experimental import pallas as pl
from jax.experimental.pallas import tpu as pltpu

N_CLASSES = 4


def finetuned_kernel(w_ref, b_ref, xt_ref, ot_ref):
    # logits_t[N, TB] = W[N, D] @ x_t[D, TB]  (MXU, f32 accumulation, no .T)
    logits = jnp.dot(
        w_ref[...], xt_ref[...], preferred_element_type=jnp.float32
    ) + b_ref[...]                                   # b_ref: [N, 1], lane-broadcast
    # Numerically-stable softmax over the class axis (axis 0 here == dim=1 of
    # the original [B, N] layout).
    m = jnp.max(logits, axis=0, keepdims=True)
    e = jnp.exp(logits - m)
    denom = jnp.sum(e, axis=0, keepdims=True)
    # Exact reciprocal: the kernel is HBM/DMA-bound, so the divide is off the
    # critical path. (Flip to approx=True if ~1e-4 rel. error is acceptable.)
    ot_ref[...] = (e * pl.reciprocal(denom, approx=False)).astype(ot_ref.dtype)


def finetuned_net(x, centroid_matrix, bias, *, tb=2048):
    """x: [B, D] f32, centroid_matrix: [N_CLASSES, D] f32, bias: [N_CLASSES] f32.

    Returns softmax(x @ centroid_matrix.T + bias, axis=1), shape [B, N_CLASSES].
    """
    B, D = x.shape
    N, Dw = centroid_matrix.shape
    assert Dw == D

    # One-time layout plumbing outside the kernel: batch onto lanes.
    x_t = x.T                        # [D, B]
    b2d = bias.reshape(N, 1)         # 2-D for clean TPU layout / broadcast

    if B <= tb:
        TB = B                       # single full-extent block (small-B path)
        Bp = B
    else:
        TB = tb                      # multiple of 128 -> unmasked lane-dense stores
        Bp = pl.cdiv(B, TB) * TB
        if Bp != B:
            # Zero-pad the batch (columns); each column's softmax is
            # independent, padded columns are sliced off below.
            x_t = jnp.pad(x_t, ((0, 0), (0, Bp - B)))

    out_t = pl.pallas_call(
        finetuned_kernel,
        out_shape=jax.ShapeDtypeStruct((N, Bp), jnp.float32),
        grid=(Bp // TB,),
        in_specs=[
            pl.BlockSpec((N, D), lambda i: (0, 0)),    # W resident across grid
            pl.BlockSpec((N, 1), lambda i: (0, 0)),    # bias resident
            pl.BlockSpec((D, TB), lambda i: (0, i)),   # batch tile of x_t
        ],
        out_specs=pl.BlockSpec((N, TB), lambda i: (0, i)),
        compiler_params=pltpu.CompilerParams(
            dimension_semantics=("parallel",),         # megacore / 2-TC sharding
            vmem_limit_bytes=48 << 20,                 # safe on v5e/v6e/v7x
        ),
    )(centroid_matrix, b2d, x_t)

    return out_t[:, :B].T            # back to [B, N_CLASSES]


def reference(x, w, b):
    logits = x @ w.T + b
    return jax.nn.softmax(logits, axis=1)


if __name__ == "__main__":
    key = jax.random.PRNGKey(0)
    kx, kw, kx2 = jax.random.split(key, 3)

    # Small shapes consistent with the module: batch=8, centroid vector len=32.
    B, D = 8, 32
    x = jax.random.normal(kx, (B, D), dtype=jnp.float32)
    centroid_matrix = jax.random.normal(kw, (N_CLASSES, D), dtype=jnp.float32)
    bias = jnp.zeros((N_CLASSES,), dtype=jnp.float32)   # fc1.bias init

    out = jax.block_until_ready(finetuned_net(x, centroid_matrix, bias))
    ref = reference(x, centroid_matrix, bias)
    assert out.shape == (B, N_CLASSES)
    assert jnp.allclose(out, ref, atol=1e-5, rtol=1e-5), "mismatch vs reference (small B)"
    assert jnp.allclose(jnp.sum(out, axis=1), 1.0, atol=1e-5), "rows must sum to 1"

    # Larger batch exercises the tiled / padded (grid > 1) path.
    B2 = 3000
    x2 = jax.random.normal(kx2, (B2, D), dtype=jnp.float32)
    out2 = jax.block_until_ready(finetuned_net(x2, centroid_matrix, bias))
    ref2 = reference(x2, centroid_matrix, bias)
    assert out2.shape == (B2, N_CLASSES)
    assert jnp.allclose(out2, ref2, atol=1e-5, rtol=1e-5), "mismatch vs reference (tiled B)"
    assert jnp.allclose(jnp.sum(out2, axis=1), 1.0, atol=1e-5), "rows must sum to 1 (tiled B)"

    print("KERNEL_OK")
</pallas_src>

<mosaic_0001>
module attributes {stable_mosaic.version = 11 : i64} {
  func.func @finetuned_kernel(%arg0: i32, %arg1: memref<4x32xf32, #tpu.memory_space<vmem>>, %arg2: memref<4x1xf32, #tpu.memory_space<vmem>>, %arg3: memref<32x8xf32, #tpu.memory_space<vmem>>, %arg4: memref<4x8xf32, #tpu.memory_space<vmem>>) attributes {dimension_semantics = [#tpu.dimension_semantics<parallel>], iteration_bounds = array<i64: 1>, scalar_prefetch = 0 : i64, scratch_operands = 0 : i64, tpu.core_type = #tpu.core_type<tc>, window_params = [{pipeline_mode = #tpu.pipeline_mode<synchronous>, transform_indices = @transform_0, window_bounds = array<i64: 4, 32>}, {pipeline_mode = #tpu.pipeline_mode<synchronous>, transform_indices = @transform_1, window_bounds = array<i64: 4, 1>}, {transform_indices = @transform_2, window_bounds = array<i64: 32, 8>}, {transform_indices = @transform_3, window_bounds = array<i64: 4, 8>}]} {
    %c0 = arith.constant 0 : index
    %c0_0 = arith.constant 0 : index
    %0 = vector.load %arg1[%c0, %c0_0] : memref<4x32xf32, #tpu.memory_space<vmem>>, vector<4x32xf32>
    %c0_1 = arith.constant 0 : index
    %c0_2 = arith.constant 0 : index
    %1 = vector.load %arg3[%c0_1, %c0_2] : memref<32x8xf32, #tpu.memory_space<vmem>>, vector<32x8xf32>
    %cst = arith.constant dense<0.000000e+00> : vector<4x8xf32>
    %2 = tpu.matmul %0, %1, %cst {dimension_numbers = #tpu.dot_dimension_numbers<[1], [0], [0], [1], [0, 0, 1, 1], [], []>} : vector<4x32xf32>, vector<32x8xf32>, vector<4x8xf32> -> vector<4x8xf32>
    %c0_3 = arith.constant 0 : index
    %c0_4 = arith.constant 0 : index
    %3 = vector.load %arg2[%c0_3, %c0_4] : memref<4x1xf32, #tpu.memory_space<vmem>>, vector<4x1xf32>
    %4 = vector.broadcast %3 : vector<4x1xf32> to vector<4x8xf32>
    %5 = arith.addf %2, %4 : vector<4x8xf32>
    %cst_5 = arith.constant dense<0xFF800000> : vector<8xf32>
    %6 = vector.multi_reduction <maximumf>, %5, %cst_5 [0] : vector<4x8xf32> to vector<8xf32>
    %7 = vector.shape_cast %6 : vector<8xf32> to vector<1x8xf32>
    %8 = vector.broadcast %7 : vector<1x8xf32> to vector<4x8xf32>
    %9 = arith.subf %5, %8 : vector<4x8xf32>
    %10 = math.exp %9 : vector<4x8xf32>
    %cst_6 = arith.constant dense<0.000000e+00> : vector<8xf32>
    %11 = vector.multi_reduction <add>, %10, %cst_6 [0] : vector<4x8xf32> to vector<8xf32>
    %12 = vector.shape_cast %11 : vector<8xf32> to vector<1x8xf32>
    %13 = tpu.reciprocal %12 : vector<1x8xf32> -> vector<1x8xf32>
    %14 = vector.broadcast %13 : vector<1x8xf32> to vector<4x8xf32>
    %15 = arith.mulf %10, %14 : vector<4x8xf32>
    %c0_7 = arith.constant 0 : index
    %c0_8 = arith.constant 0 : index
    %16 = vector.load %arg4[%c0_7, %c0_8] : memref<4x8xf32, #tpu.memory_space<vmem>>, vector<4x8xf32>
    tpu.vector_store %arg4[%c0_7, %c0_8], %15 {strides = array<i32>} : memref<4x8xf32, #tpu.memory_space<vmem>>, vector<4x8xf32>,
    return
  }
  func.func @transform_0(%arg0: i32) -> (i32, i32) {
    %c0_i32 = arith.constant 0 : i32
    %c0_i32_0 = arith.constant 0 : i32
    %c0_i32_1 = arith.constant 0 : i32
    return %c0_i32, %c0_i32_0 : i32, i32
  }
  func.func @transform_1(%arg0: i32) -> (i32, i32) {
    %c0_i32 = arith.constant 0 : i32
    %c0_i32_0 = arith.constant 0 : i32
    %c0_i32_1 = arith.constant 0 : i32
    return %c0_i32, %c0_i32_0 : i32, i32
  }
  func.func @transform_2(%arg0: i32) -> (i32, i32) {
    %c0_i32 = arith.constant 0 : i32
    %c0_i32_0 = arith.constant 0 : i32
    return %c0_i32, %arg0 : i32, i32
  }
  func.func @transform_3(%arg0: i32) -> (i32, i32) {
    %c0_i32 = arith.constant 0 : i32
    %c0_i32_0 = arith.constant 0 : i32
    return %c0_i32, %arg0 : i32, i32
  }
}

</mosaic_0001>

<llo_original>
// kernel: tpu_custom_call.1
$region0: #{tpu_custom_call.1}
  #allocation0 [shape = 'u32[]', space=smem, size = 0x4, offset = 0x4, fixed_abs, tag = 'smem constant byte address 0x4 - core index']
  #allocation1 [shape = 'u32[144,128]{1,0:T(1,128)}', space=vmem, size = 0x12000, scoped, tag = 'internal scratch']
  %s0 = inlined_call_operand.vmem [shape: f32[4,32], index: 0, kind: input, shape index: {}]
  %s1 = inlined_call_operand.vmem [shape: f32[4,1], index: 1, kind: input, shape index: {}]
  %s2 = inlined_call_operand.vmem [shape: f32[32,8], index: 2, kind: input, shape index: {}]
  %s3 = inlined_call_operand.hbm [shape: f32[4,8], index: 3, kind: output, shape index: {}]
  %s4 = sld [smem:[#allocation0]]
  $region22: #{tpu_custom_call.1} parent=0
    _
  %s6 = ssub.s32 1, %s4
  %s7 = scalar_select 0, %s6, %s4
  $region1: #{tpu_custom_call.1} parent=0
    #allocation2 [shape = 'u8[2048]{0}', space=vmem, size = 0x800, scoped, tag = 'output window, operand 0, single buffered']
    #allocation3 [shape = 's32[1]{0}', space=sflag, size = 0x4, scoped, tag = 'scoped memory for tpu_custom_call.1']
    %8 = vsyncpa [#allocation3], 0
    // Predicated region
    $region2: #{tpu_custom_call.1} parent=1 // pred_check
      _
    $region3: #{tpu_custom_call.1} parent=1 // pred_check_branch
      %10 = sbr.rel (0) target = $region5
    $region4: #{tpu_custom_call.1} parent=1 // pred_region
      _
    $region5: #{tpu_custom_call.1} parent=1 // pred_fallthru
      _
    // Predicated region
    $region6: #{tpu_custom_call.1} parent=1 // pred_check
      _
    $region7: #{tpu_custom_call.1} parent=1 // pred_check_branch
      %12 = sbr.rel (0) target = $region9
    $region8: #{tpu_custom_call.1} parent=1 // pred_region
      _
    $region9: #{tpu_custom_call.1} parent=1 // pred_fallthru
      _
    // Predicated region
    $region10: #{tpu_custom_call.1} parent=1 // pred_check
      _
    $region11: #{tpu_custom_call.1} parent=1 // pred_check_branch
      %14 = sbr.rel (0) target = $region13
    $region12: #{tpu_custom_call.1} parent=1 // pred_region
      _
    $region13: #{tpu_custom_call.1} parent=1 // pred_fallthru
      _
    %v15 = vld [vmem:[%s0] sm:$0xf]
    %v16 = vld [vmem:[%s2] sm:$0xff]
    %v17 = vld [vmem:[%s2 + $0x8] sm:$0xff]
    %v18 = vld [vmem:[%s2 + $0x10] sm:$0xff]
    %v19 = vld [vmem:[%s2 + $0x18] sm:$0xff]
    %v20 = vld [vmem:[%s1] sm:$0xf]
    %22 = vset.pattern.permute.xlu0 0
    %23 = vperm.xlu0 %22, %v20
    %v24 = vpop.permute.xlu0 %23
    %vm26 = vcmask 261120
    %v28 = vsel %vm26, %v15, 0
    %30 = vmatprep.subr.mxu0 0.0
    %31 = vmatpush1.msra.mxu0 %v16
    %32 = vmatprep.subr.mxu0 0.0
    %33 = vmatpush1.msra.mxu0 %v17
    %34 = vmatprep.subr.mxu0 0.0
    %35 = vmatpush1.msra.mxu0 %v18
    %36 = vmatprep.subr.mxu0 0.0
    %37 = vmatpush1.msra.mxu0 %v19
    %38 = vmatprep.subr.mxu0 0.0
    %39 = vmatpush1.msra.mxu0 0.0
    %40 = vmatprep.subr.mxu0 0.0
    %41 = vmatpush1.msra.mxu0 0.0
    %42 = vmatprep.subr.mxu0 0.0
    %43 = vmatpush1.msra.mxu0 0.0
    %44 = vmatprep.subr.mxu0 0.0
    %45 = vmatpush1.msra.mxu0 0.0
    %46 = vmatprep.subr.mxu0 0.0
    %47 = vmatpush1.msra.mxu0 0.0
    %48 = vmatprep.subr.mxu0 0.0
    %49 = vmatpush1.msra.mxu0 0.0
    %50 = vmatprep.subr.mxu0 0.0
    %51 = vmatpush1.msra.mxu0 0.0
    %52 = vmatprep.subr.mxu0 0.0
    %53 = vmatpush1.msra.mxu0 0.0
    %54 = vmatprep.subr.mxu0 0.0
    %55 = vmatpush1.msra.mxu0 0.0
    %56 = vmatprep.subr.mxu0 0.0
    %57 = vmatpush1.msra.mxu0 0.0
    %58 = vmatprep.subr.mxu0 0.0
    %59 = vmatpush1.msra.mxu0 0.0
    %60 = vmatprep.subr.mxu0 0.0
    %61 = vmatpush1.msra.mxu0 0.0
    %62 = vmatprep.subr.mxu0 0.0
    %63 = vmatpush1.msra.mxu0 0.0
    %64 = vmatprep.subr.mxu0 0.0
    %65 = vmatpush1.msra.mxu0 0.0
    %66 = vmatprep.subr.mxu0 0.0
    %67 = vmatpush1.msra.mxu0 0.0
    %68 = vmatprep.subr.mxu0 0.0
    %69 = vmatpush1.msra.mxu0 0.0
    %70 = vmatprep.subr.mxu0 0.0
    %71 = vmatpush1.msra.mxu0 0.0
    %72 = vmatprep.subr.mxu0 0.0
    %73 = vmatpush1.msra.mxu0 0.0
    %74 = vmatprep.subr.mxu0 0.0
    %75 = vmatpush1.msra.mxu0 0.0
    %76 = vmatprep.subr.mxu0 0.0
    %77 = vmatpush1.msra.mxu0 0.0
    %78 = vmatprep.subr.mxu0 0.0
    %79 = vmatpush1.msra.mxu0 0.0
    %80 = vmatprep.subr.mxu0 0.0
    %81 = vmatpush1.msra.mxu0 0.0
    %82 = vmatprep.subr.mxu0 0.0
    %83 = vmatpush1.msra.mxu0 0.0
    %84 = vmatprep.subr.mxu0 0.0
    %85 = vmatpush1.msra.mxu0 0.0
    %86 = vmatprep.subr.mxu0 0.0
    %87 = vmatpush1.msra.mxu0 0.0
    %88 = vmatprep.subr.mxu0 0.0
    %89 = vmatpush1.msra.mxu0 0.0
    %90 = vmatprep.subr.mxu0 0.0
    %91 = vmatpush1.msra.mxu0 0.0
    %92 = vmatprep.subr.mxu0 0.0
    %93 = vmatpush1.msra.mxu0 0.0
    %94 = vmatprep.mubr.f32.mxu0 0.0
    %95 = vmatmul.mubr.f32.gmra.mrb[0].mxu0 %v28
    %v96 = vpop.f32.mrb[0].mxu0
    %v97 = vadd.f32 %v24, %v96
    %v98 = vpop.f32.mrb[0].mxu0
    %99 = vdwg.mxu0
    %vm100 = vcmask 60416
    %v101 = vsel %vm100, %v97, -inf
    %v102 = vrot.slane %v101, 4
    %v103 = vmax.f32 %v101, %v102
    %v104 = vrot.slane %v103, 2
    %v105 = vmax.f32 %v103, %v104
    %v106 = vrot.slane %v105, 1
    %v107 = vmax.f32 %v105, %v106
    %v108 = vsub.f32 %v97, %v107
    %v109 = vmul.f32 %v108, 1.442695
    %v110 = vpow.pop %v109
    %v111 = vsel %vm100, %v110, 0.0
    %v112 = vrot.slane %v111, 4
    %v113 = vadd.f32 %v111, %v112
    %v114 = vrot.slane %v113, 2
    %v115 = vadd.f32 %v113, %v114
    %v116 = vrot.slane %v115, 1
    %v117 = vadd.f32 %v115, %v116
    %v118 = vrcp.pop %v117
    %v119 = vmul.f32 %v110, %v118
    %120 = vst.msk [vmem:[#allocation2] sm:$0xf] %vm100, %v119
    // Predicated region
    $region14: #{tpu_custom_call.1} parent=1 // pred_check
      _
    $region15: #{tpu_custom_call.1} parent=1 // pred_check_branch
      %122 = sbr.rel (0) target = $region17
    $region16: #{tpu_custom_call.1} parent=1 // pred_region
      %s124 = ssub.s32 64, 64
      %125 = vsyncadd [#allocation3], %s124
      %s127 = sshll.u32 [#allocation2], 4
      %s128 = int_to_ptr.vmem [resolvable:$true] %s127
      %130 = dma.vmem_to_hbm [thread:$0]  %s128, 64, %s3, [#allocation3]
    $region17: #{tpu_custom_call.1} parent=1 // pred_fallthru
      _
    // Predicated region
    $region18: #{tpu_custom_call.1} parent=1 // pred_check
      _
    $region19: #{tpu_custom_call.1} parent=1 // pred_check_branch
      %132 = sbr.rel (0) target = $region21
    $region20: #{tpu_custom_call.1} parent=1 // pred_region
      %133 = dma.done [#allocation3], 64
    $region21: #{tpu_custom_call.1} parent=1 // pred_fallthru
      _
    %134 = vsyncpa [#allocation3], 1

</llo_original>
